<compile_context>
chip_gen: v7x
topology: tpu7x:2x2x1
jax: 0.10.0
libtpu: 0.0.40
codegen_flags: <defaults>
</compile_context>

<pallas_src>
import jax
import jax.numpy as jnp
from jax.experimental import pallas as pl
from jax.experimental.pallas import tpu as pltpu


def make_rnn_fc_kernel(T: int, Bp: int):
    """Builds the kernel with static T (timesteps) and Bp (padded batch)."""

    def kernel(x_ref, wih_ref, whh_ref, brnn_ref, wfc_ref, bfc_ref, out_ref):
        # x_ref   : (T*Bp, Ip)  time-major padded input, row = t*Bp + b
        # wih_ref : (Ip, Hp)    W_ih^T (zero padded)
        # whh_ref : (Hp, Hp)    W_hh^T (zero padded)
        # brnn_ref: (1, Hp)     b_ih + b_hh (zero padded)
        # wfc_ref : (Hp, Op)    W_fc^T (zero padded)
        # bfc_ref : (1, Op)     b_fc (zero padded)
        # out_ref : (Bp, Op)    lane-dense output tile

        # ---- Pre-pass: hoisted input projection, ONE batched MXU matmul ----
        # (T*Bp, Ip) @ (Ip, Hp) + bias, off the serial dependence chain.
        xproj = (jnp.dot(x_ref[...], wih_ref[...],
                         preferred_element_type=jnp.float32)
                 + brnn_ref[...])                       # (T*Bp, Hp)

        # Hoisted VMEM loads (issued once, reused across all unrolled steps).
        whh = whh_ref[...]                              # (Hp, Hp)
        Hp = whh.shape[0]

        # ---- Serial recurrence: fully unrolled, one matmul + tanh per step ----
        h = jnp.zeros((Bp, Hp), jnp.float32)            # exactly one (8,128) f32 tile
        for t in range(T):                              # static unroll, static slices
            xt = xproj[t * Bp:(t + 1) * Bp, :]          # contiguous (Bp, Hp) tile
            h = jnp.tanh(xt + jnp.dot(h, whh, preferred_element_type=jnp.float32))

        # ---- Final Linear on the last hidden state ----
        out_ref[...] = (jnp.dot(h, wfc_ref[...], preferred_element_type=jnp.float32)
                        + bfc_ref[...]).astype(out_ref.dtype)

    return kernel


def marathi_transcription_forward(x, w_ih, w_hh, b_ih, b_hh, w_fc, b_fc):
    """x: (B, T, I) float32 (PyTorch batch_first). Returns (B, O)."""
    B, T, I = x.shape
    H = w_hh.shape[0]
    O = w_fc.shape[0]

    LANE, SUB = 128, 8
    Bp = ((B + SUB - 1) // SUB) * SUB
    Ip = ((I + LANE - 1) // LANE) * LANE
    Hp = ((H + LANE - 1) // LANE) * LANE
    Op = ((O + LANE - 1) // LANE) * LANE

    f32 = jnp.float32

    # ---- Layout glue (plain JAX): zero-pad to (8,128)-aligned tiles, fold the
    # two RNN biases, pre-transpose weights, and lay x out time-major so each
    # per-step slice of the hoisted projection is one contiguous (Bp, Hp) tile.
    x_p = jnp.pad(x.astype(f32), ((0, Bp - B), (0, 0), (0, Ip - I)))
    x_tb = jnp.transpose(x_p, (1, 0, 2)).reshape(T * Bp, Ip)            # (T*Bp, Ip)

    wih_t = jnp.pad(jnp.transpose(w_ih).astype(f32), ((0, Ip - I), (0, Hp - H)))
    whh_t = jnp.pad(jnp.transpose(w_hh).astype(f32), ((0, Hp - H), (0, Hp - H)))
    brnn = jnp.pad((b_ih + b_hh).astype(f32), (0, Hp - H)).reshape(1, Hp)
    wfc_t = jnp.pad(jnp.transpose(w_fc).astype(f32), ((0, Hp - H), (0, Op - O)))
    bfc = jnp.pad(b_fc.astype(f32), (0, Op - O)).reshape(1, Op)

    vmem = pl.BlockSpec(memory_space=pltpu.MemorySpace.VMEM)

    flops = 2 * T * Bp * (Ip * Hp + Hp * Hp) + 2 * Bp * Hp * Op
    bytes_accessed = 4 * (x_tb.size + wih_t.size + whh_t.size + brnn.size
                          + wfc_t.size + bfc.size + Bp * Op)

    out_p = pl.pallas_call(
        make_rnn_fc_kernel(T, Bp),
        out_shape=jax.ShapeDtypeStruct((Bp, Op), f32),
        in_specs=[vmem] * 6,
        out_specs=vmem,
        cost_estimate=pl.CostEstimate(
            flops=flops,
            transcendentals=T * Bp * Hp,
            bytes_accessed=bytes_accessed),
    )(x_tb, wih_t, whh_t, brnn, wfc_t, bfc)

    return out_p[:B, :O].astype(x.dtype)


def _reference_forward(x, w_ih, w_hh, b_ih, b_hh, w_fc, b_fc):
    """Pure-JAX reference mirroring torch.nn.RNN(batch_first=True) + Linear."""
    B, T, I = x.shape
    H = w_hh.shape[0]
    h = jnp.zeros((B, H), jnp.float32)
    for t in range(T):
        h = jnp.tanh(x[:, t, :] @ w_ih.T + b_ih + h @ w_hh.T + b_hh)
    return h @ w_fc.T + b_fc


if __name__ == "__main__":
    # Small shapes consistent with the module (input_size=100, output_size=10).
    B, T = 2, 8
    input_size, hidden_size, output_size = 100, 32, 10

    key = jax.random.PRNGKey(0)
    k_x, k_wih, k_whh, k_bih, k_bhh, k_wfc, k_bfc = jax.random.split(key, 7)

    # Deterministic init (PyTorch-style U(-1/sqrt(H), 1/sqrt(H)) scaling).
    s_rnn = 1.0 / jnp.sqrt(hidden_size)
    s_fc = 1.0 / jnp.sqrt(hidden_size)

    x = jax.random.normal(k_x, (B, T, input_size), jnp.float32)
    w_ih = jax.random.uniform(k_wih, (hidden_size, input_size), jnp.float32, -s_rnn, s_rnn)
    w_hh = jax.random.uniform(k_whh, (hidden_size, hidden_size), jnp.float32, -s_rnn, s_rnn)
    b_ih = jax.random.uniform(k_bih, (hidden_size,), jnp.float32, -s_rnn, s_rnn)
    b_hh = jax.random.uniform(k_bhh, (hidden_size,), jnp.float32, -s_rnn, s_rnn)
    w_fc = jax.random.uniform(k_wfc, (output_size, hidden_size), jnp.float32, -s_fc, s_fc)
    b_fc = jax.random.uniform(k_bfc, (output_size,), jnp.float32, -s_fc, s_fc)

    fwd = jax.jit(marathi_transcription_forward)
    out = fwd(x, w_ih, w_hh, b_ih, b_hh, w_fc, b_fc)
    out = jax.block_until_ready(out)

    ref = _reference_forward(x, w_ih, w_hh, b_ih, b_hh, w_fc, b_fc)
    assert out.shape == (B, output_size)
    assert jnp.allclose(out, ref, atol=1e-4, rtol=1e-4), "Pallas output mismatch vs reference"

    print("KERNEL_OK")
</pallas_src>

<mosaic_0001>
module attributes {stable_mosaic.version = 11 : i64} {
  func.func @kernel(%arg0: memref<64x128xf32, #tpu.memory_space<vmem>>, %arg1: memref<128x128xf32, #tpu.memory_space<vmem>>, %arg2: memref<128x128xf32, #tpu.memory_space<vmem>>, %arg3: memref<1x128xf32, #tpu.memory_space<vmem>>, %arg4: memref<128x128xf32, #tpu.memory_space<vmem>>, %arg5: memref<1x128xf32, #tpu.memory_space<vmem>>, %arg6: memref<8x128xf32, #tpu.memory_space<vmem>>) attributes {dimension_semantics = [], scalar_prefetch = 0 : i64, scratch_operands = 0 : i64, tpu.core_type = #tpu.core_type<tc>} {
    %c0 = arith.constant 0 : index
    %c0_0 = arith.constant 0 : index
    %0 = vector.load %arg0[%c0, %c0_0] : memref<64x128xf32, #tpu.memory_space<vmem>>, vector<64x128xf32>
    %c0_1 = arith.constant 0 : index
    %c0_2 = arith.constant 0 : index
    %1 = vector.load %arg1[%c0_1, %c0_2] : memref<128x128xf32, #tpu.memory_space<vmem>>, vector<128x128xf32>
    %cst = arith.constant dense<0.000000e+00> : vector<64x128xf32>
    %2 = tpu.matmul %0, %1, %cst {dimension_numbers = #tpu.dot_dimension_numbers<[1], [0], [0], [1], [0, 0, 1, 1], [], []>} : vector<64x128xf32>, vector<128x128xf32>, vector<64x128xf32> -> vector<64x128xf32>
    %c0_3 = arith.constant 0 : index
    %c0_4 = arith.constant 0 : index
    %3 = vector.load %arg3[%c0_3, %c0_4] : memref<1x128xf32, #tpu.memory_space<vmem>>, vector<1x128xf32>
    %4 = vector.broadcast %3 : vector<1x128xf32> to vector<64x128xf32>
    %5 = arith.addf %2, %4 : vector<64x128xf32>
    %c0_5 = arith.constant 0 : index
    %c0_6 = arith.constant 0 : index
    %6 = vector.load %arg2[%c0_5, %c0_6] : memref<128x128xf32, #tpu.memory_space<vmem>>, vector<128x128xf32>
    %cst_7 = arith.constant 0.000000e+00 : f32
    %7 = vector.broadcast %cst_7 : f32 to vector<8x128xf32>
    %8 = vector.extract_strided_slice %5 {offsets = [0, 0], sizes = [8, 128], strides = [1, 1]} : vector<64x128xf32> to vector<8x128xf32>
    %cst_8 = arith.constant dense<0.000000e+00> : vector<8x128xf32>
    %9 = tpu.matmul %7, %6, %cst_8 {dimension_numbers = #tpu.dot_dimension_numbers<[1], [0], [0], [1], [0, 0, 1, 1], [], []>} : vector<8x128xf32>, vector<128x128xf32>, vector<8x128xf32> -> vector<8x128xf32>
    %10 = arith.addf %8, %9 : vector<8x128xf32>
    %11 = math.tanh %10 : vector<8x128xf32>
    %12 = vector.extract_strided_slice %5 {offsets = [8, 0], sizes = [8, 128], strides = [1, 1]} : vector<64x128xf32> to vector<8x128xf32>
    %cst_9 = arith.constant dense<0.000000e+00> : vector<8x128xf32>
    %13 = tpu.matmul %11, %6, %cst_9 {dimension_numbers = #tpu.dot_dimension_numbers<[1], [0], [0], [1], [0, 0, 1, 1], [], []>} : vector<8x128xf32>, vector<128x128xf32>, vector<8x128xf32> -> vector<8x128xf32>
    %14 = arith.addf %12, %13 : vector<8x128xf32>
    %15 = math.tanh %14 : vector<8x128xf32>
    %16 = vector.extract_strided_slice %5 {offsets = [16, 0], sizes = [8, 128], strides = [1, 1]} : vector<64x128xf32> to vector<8x128xf32>
    %cst_10 = arith.constant dense<0.000000e+00> : vector<8x128xf32>
    %17 = tpu.matmul %15, %6, %cst_10 {dimension_numbers = #tpu.dot_dimension_numbers<[1], [0], [0], [1], [0, 0, 1, 1], [], []>} : vector<8x128xf32>, vector<128x128xf32>, vector<8x128xf32> -> vector<8x128xf32>
    %18 = arith.addf %16, %17 : vector<8x128xf32>
    %19 = math.tanh %18 : vector<8x128xf32>
    %20 = vector.extract_strided_slice %5 {offsets = [24, 0], sizes = [8, 128], strides = [1, 1]} : vector<64x128xf32> to vector<8x128xf32>
    %cst_11 = arith.constant dense<0.000000e+00> : vector<8x128xf32>
    %21 = tpu.matmul %19, %6, %cst_11 {dimension_numbers = #tpu.dot_dimension_numbers<[1], [0], [0], [1], [0, 0, 1, 1], [], []>} : vector<8x128xf32>, vector<128x128xf32>, vector<8x128xf32> -> vector<8x128xf32>
    %22 = arith.addf %20, %21 : vector<8x128xf32>
    %23 = math.tanh %22 : vector<8x128xf32>
    %24 = vector.extract_strided_slice %5 {offsets = [32, 0], sizes = [8, 128], strides = [1, 1]} : vector<64x128xf32> to vector<8x128xf32>
    %cst_12 = arith.constant dense<0.000000e+00> : vector<8x128xf32>
    %25 = tpu.matmul %23, %6, %cst_12 {dimension_numbers = #tpu.dot_dimension_numbers<[1], [0], [0], [1], [0, 0, 1, 1], [], []>} : vector<8x128xf32>, vector<128x128xf32>, vector<8x128xf32> -> vector<8x128xf32>
    %26 = arith.addf %24, %25 : vector<8x128xf32>
    %27 = math.tanh %26 : vector<8x128xf32>
    %28 = vector.extract_strided_slice %5 {offsets = [40, 0], sizes = [8, 128], strides = [1, 1]} : vector<64x128xf32> to vector<8x128xf32>
    %cst_13 = arith.constant dense<0.000000e+00> : vector<8x128xf32>
    %29 = tpu.matmul %27, %6, %cst_13 {dimension_numbers = #tpu.dot_dimension_numbers<[1], [0], [0], [1], [0, 0, 1, 1], [], []>} : vector<8x128xf32>, vector<128x128xf32>, vector<8x128xf32> -> vector<8x128xf32>
    %30 = arith.addf %28, %29 : vector<8x128xf32>
    %31 = math.tanh %30 : vector<8x128xf32>
    %32 = vector.extract_strided_slice %5 {offsets = [48, 0], sizes = [8, 128], strides = [1, 1]} : vector<64x128xf32> to vector<8x128xf32>
    %cst_14 = arith.constant dense<0.000000e+00> : vector<8x128xf32>
    %33 = tpu.matmul %31, %6, %cst_14 {dimension_numbers = #tpu.dot_dimension_numbers<[1], [0], [0], [1], [0, 0, 1, 1], [], []>} : vector<8x128xf32>, vector<128x128xf32>, vector<8x128xf32> -> vector<8x128xf32>
    %34 = arith.addf %32, %33 : vector<8x128xf32>
    %35 = math.tanh %34 : vector<8x128xf32>
    %36 = vector.extract_strided_slice %5 {offsets = [56, 0], sizes = [8, 128], strides = [1, 1]} : vector<64x128xf32> to vector<8x128xf32>
    %cst_15 = arith.constant dense<0.000000e+00> : vector<8x128xf32>
    %37 = tpu.matmul %35, %6, %cst_15 {dimension_numbers = #tpu.dot_dimension_numbers<[1], [0], [0], [1], [0, 0, 1, 1], [], []>} : vector<8x128xf32>, vector<128x128xf32>, vector<8x128xf32> -> vector<8x128xf32>
    %38 = arith.addf %36, %37 : vector<8x128xf32>
    %39 = math.tanh %38 : vector<8x128xf32>
    %c0_16 = arith.constant 0 : index
    %c0_17 = arith.constant 0 : index
    %40 = vector.load %arg4[%c0_16, %c0_17] : memref<128x128xf32, #tpu.memory_space<vmem>>, vector<128x128xf32>
    %cst_18 = arith.constant dense<0.000000e+00> : vector<8x128xf32>
    %41 = tpu.matmul %39, %40, %cst_18 {dimension_numbers = #tpu.dot_dimension_numbers<[1], [0], [0], [1], [0, 0, 1, 1], [], []>} : vector<8x128xf32>, vector<128x128xf32>, vector<8x128xf32> -> vector<8x128xf32>
    %c0_19 = arith.constant 0 : index
    %c0_20 = arith.constant 0 : index
    %42 = vector.load %arg5[%c0_19, %c0_20] : memref<1x128xf32, #tpu.memory_space<vmem>>, vector<1x128xf32>
    %43 = vector.broadcast %42 : vector<1x128xf32> to vector<8x128xf32>
    %44 = arith.addf %41, %43 : vector<8x128xf32>
    %c0_21 = arith.constant 0 : index
    %c0_22 = arith.constant 0 : index
    %45 = vector.load %arg6[%c0_21, %c0_22] : memref<8x128xf32, #tpu.memory_space<vmem>>, vector<8x128xf32>
    tpu.vector_store %arg6[%c0_21, %c0_22], %44 {strides = array<i32>} : memref<8x128xf32, #tpu.memory_space<vmem>>, vector<8x128xf32>,
    return
  }
}

</mosaic_0001>

<llo_original>
// kernel: marathi_transcription_forward.1
$region0: #{marathi_transcription_forward.1}
  #allocation0 [shape = 'u32[]', space=smem, size = 0x4, offset = 0x4, fixed_abs, tag = 'smem constant byte address 0x4 - core index']
  #allocation1 [shape = 'u32[144,128]{1,0:T(1,128)}', space=vmem, size = 0x12000, scoped, tag = 'internal scratch']
  %s0 = inlined_call_operand.vmem [shape: f32[64,128], index: 0, kind: input, shape index: {}]
  %s1 = inlined_call_operand.vmem [shape: f32[128,128], index: 1, kind: input, shape index: {}]
  %s2 = inlined_call_operand.vmem [shape: f32[128,128], index: 2, kind: input, shape index: {}]
  %s3 = inlined_call_operand.vmem [shape: f32[1,128], index: 3, kind: input, shape index: {}]
  %s4 = inlined_call_operand.vmem [shape: f32[128,128], index: 4, kind: input, shape index: {}]
  %s5 = inlined_call_operand.vmem [shape: f32[1,128], index: 5, kind: input, shape index: {}]
  %s6 = inlined_call_operand.vmem [shape: f32[8,128], index: 6, kind: output, shape index: {}]
  %s7 = sld [smem:[#allocation0]]
  $region34: #{marathi_transcription_forward.1} parent=0
    _
  %s9 = ssub.s32 1, %s7
  %s10 = scalar_select 0, %s9, %s7
  // Predicated region
  $region2: #{marathi_transcription_forward.1} parent=0 // pred_check
    _
  $region3: #{marathi_transcription_forward.1} parent=0 // pred_check_branch
    %12 = sbr.rel (0) target = $region5
  $region4: #{marathi_transcription_forward.1} parent=0 // pred_region
    _
  $region5: #{marathi_transcription_forward.1} parent=0 // pred_fallthru
    _
  // Predicated region
  $region6: #{marathi_transcription_forward.1} parent=0 // pred_check
    _
  $region7: #{marathi_transcription_forward.1} parent=0 // pred_check_branch
    %14 = sbr.rel (0) target = $region9
  $region8: #{marathi_transcription_forward.1} parent=0 // pred_region
    _
  $region9: #{marathi_transcription_forward.1} parent=0 // pred_fallthru
    _
  // Predicated region
  $region10: #{marathi_transcription_forward.1} parent=0 // pred_check
    _
  $region11: #{marathi_transcription_forward.1} parent=0 // pred_check_branch
    %16 = sbr.rel (0) target = $region13
  $region12: #{marathi_transcription_forward.1} parent=0 // pred_region
    _
  $region13: #{marathi_transcription_forward.1} parent=0 // pred_fallthru
    _
  // Predicated region
  $region14: #{marathi_transcription_forward.1} parent=0 // pred_check
    _
  $region15: #{marathi_transcription_forward.1} parent=0 // pred_check_branch
    %18 = sbr.rel (0) target = $region17
  $region16: #{marathi_transcription_forward.1} parent=0 // pred_region
    _
  $region17: #{marathi_transcription_forward.1} parent=0 // pred_fallthru
    _
  // Predicated region
  $region18: #{marathi_transcription_forward.1} parent=0 // pred_check
    _
  $region19: #{marathi_transcription_forward.1} parent=0 // pred_check_branch
    %20 = sbr.rel (0) target = $region21
  $region20: #{marathi_transcription_forward.1} parent=0 // pred_region
    _
  $region21: #{marathi_transcription_forward.1} parent=0 // pred_fallthru
    _
  // Predicated region
  $region22: #{marathi_transcription_forward.1} parent=0 // pred_check
    _
  $region23: #{marathi_transcription_forward.1} parent=0 // pred_check_branch
    %22 = sbr.rel (0) target = $region25
  $region24: #{marathi_transcription_forward.1} parent=0 // pred_region
    _
  $region25: #{marathi_transcription_forward.1} parent=0 // pred_fallthru
    _
  %v23 = vld [vmem:[%s0] sm:$0xff]
  %v24 = vld [vmem:[%s0 + $0x8] sm:$0xff]
  %v25 = vld [vmem:[%s0 + $0x10] sm:$0xff]
  %v26 = vld [vmem:[%s0 + $0x18] sm:$0xff]
  %v27 = vld [vmem:[%s0 + $0x20] sm:$0xff]
  %v28 = vld [vmem:[%s0 + $0x28] sm:$0xff]
  %v29 = vld [vmem:[%s0 + $0x30] sm:$0xff]
  %v30 = vld [vmem:[%s0 + $0x38] sm:$0xff]
  %v31 = vld [vmem:[%s1] sm:$0xff]
  %v32 = vld [vmem:[%s1 + $0x8] sm:$0xff]
  %v33 = vld [vmem:[%s1 + $0x10] sm:$0xff]
  %v34 = vld [vmem:[%s1 + $0x18] sm:$0xff]
  %v35 = vld [vmem:[%s1 + $0x20] sm:$0xff]
  %v36 = vld [vmem:[%s1 + $0x28] sm:$0xff]
  %v37 = vld [vmem:[%s1 + $0x30] sm:$0xff]
  %v38 = vld [vmem:[%s1 + $0x38] sm:$0xff]
  %v39 = vld [vmem:[%s1 + $0x40] sm:$0xff]
  %v40 = vld [vmem:[%s1 + $0x48] sm:$0xff]
  %v41 = vld [vmem:[%s1 + $0x50] sm:$0xff]
  %v42 = vld [vmem:[%s1 + $0x58] sm:$0xff]
  %v43 = vld [vmem:[%s1 + $0x60] sm:$0xff]
  %v44 = vld [vmem:[%s1 + $0x68] sm:$0xff]
  %v45 = vld [vmem:[%s1 + $0x70] sm:$0xff]
  %v46 = vld [vmem:[%s1 + $0x78] sm:$0xff]
  %v47 = vld [vmem:[%s3] sm:$0x1]
  %v49 = vlaneseq
  %v50 = vshrl.u32 %v49, 7
  %v51 = vsub.s32 0, %v50
  %v52 = vrot.slane %v47, %v51
  %54 = vmatprep.subr.mxu0 0.0
  %55 = vmatpush1.msra.mxu0 %v31
  %56 = vmatprep.subr.mxu0 0.0
  %57 = vmatpush1.msra.mxu0 %v32
  %58 = vmatprep.subr.mxu0 0.0
  %59 = vmatpush1.msra.mxu0 %v33
  %60 = vmatprep.subr.mxu0 0.0
  %61 = vmatpush1.msra.mxu0 %v34
  %62 = vmatprep.subr.mxu0 0.0
  %63 = vmatpush1.msra.mxu0 %v35
  %64 = vmatprep.subr.mxu0 0.0
  %65 = vmatpush1.msra.mxu0 %v36
  %66 = vmatprep.subr.mxu0 0.0
  %67 = vmatpush1.msra.mxu0 %v37
  %68 = vmatprep.subr.mxu0 0.0
  %69 = vmatpush1.msra.mxu0 %v38
  %70 = vmatprep.subr.mxu0 0.0
  %71 = vmatpush1.msra.mxu0 %v39
  %72 = vmatprep.subr.mxu0 0.0
  %73 = vmatpush1.msra.mxu0 %v40
  %74 = vmatprep.subr.mxu0 0.0
  %75 = vmatpush1.msra.mxu0 %v41
  %76 = vmatprep.subr.mxu0 0.0
  %77 = vmatpush1.msra.mxu0 %v42
  %78 = vmatprep.subr.mxu0 0.0
  %79 = vmatpush1.msra.mxu0 %v43
  %80 = vmatprep.subr.mxu0 0.0
  %81 = vmatpush1.msra.mxu0 %v44
  %82 = vmatprep.subr.mxu0 0.0
  %83 = vmatpush1.msra.mxu0 %v45
  %84 = vmatprep.subr.mxu0 0.0
  %85 = vmatpush1.msra.mxu0 %v46
  %86 = vmatprep.subr.mxu0 0.0
  %87 = vmatpush1.msra.mxu0 0.0
  %88 = vmatprep.subr.mxu0 0.0
  %89 = vmatpush1.msra.mxu0 0.0
  %90 = vmatprep.subr.mxu0 0.0
  %91 = vmatpush1.msra.mxu0 0.0
  %92 = vmatprep.subr.mxu0 0.0
  %93 = vmatpush1.msra.mxu0 0.0
  %94 = vmatprep.subr.mxu0 0.0
  %95 = vmatpush1.msra.mxu0 0.0
  %96 = vmatprep.subr.mxu0 0.0
  %97 = vmatpush1.msra.mxu0 0.0
  %98 = vmatprep.subr.mxu0 0.0
  %99 = vmatpush1.msra.mxu0 0.0
  %100 = vmatprep.subr.mxu0 0.0
  %101 = vmatpush1.msra.mxu0 0.0
  %102 = vmatprep.subr.mxu0 0.0
  %103 = vmatpush1.msra.mxu0 0.0
  %104 = vmatprep.subr.mxu0 0.0
  %105 = vmatpush1.msra.mxu0 0.0
  %106 = vmatprep.subr.mxu0 0.0
  %107 = vmatpush1.msra.mxu0 0.0
  %108 = vmatprep.subr.mxu0 0.0
  %109 = vmatpush1.msra.mxu0 0.0
  %110 = vmatprep.subr.mxu0 0.0
  %111 = vmatpush1.msra.mxu0 0.0
  %112 = vmatprep.subr.mxu0 0.0
  %113 = vmatpush1.msra.mxu0 0.0
  %114 = vmatprep.subr.mxu0 0.0
  %115 = vmatpush1.msra.mxu0 0.0
  %116 = vmatprep.subr.mxu0 0.0
  %117 = vmatpush1.msra.mxu0 0.0
  %118 = vmatprep.mubr.f32.mxu0 0.0
  %119 = vmatmul.mubr.f32.gmra.mrb[0].mxu0 %v23
  %v120 = vpop.f32.mrb[0].mxu0
  %v121 = vadd.f32 %v52, %v120
  %v122 = vpop.f32.mrb[0].mxu0
  %123 = vmatprep.mubr.f32.mxu0 0.0
  %124 = vmatmul.mubr.f32.gmra.mrb[0].mxu0 %v24
  %v125 = vpop.f32.mrb[0].mxu0
  %v126 = vadd.f32 %v52, %v125
  %v127 = vpop.f32.mrb[0].mxu0
  %128 = vmatprep.mubr.f32.mxu0 0.0
  %129 = vmatmul.mubr.f32.gmra.mrb[0].mxu0 %v25
  %v130 = vpop.f32.mrb[0].mxu0
  %v131 = vadd.f32 %v52, %v130
  %v132 = vpop.f32.mrb[0].mxu0
  %133 = vmatprep.mubr.f32.mxu0 0.0
  %134 = vmatmul.mubr.f32.gmra.mrb[0].mxu0 %v26
  %v135 = vpop.f32.mrb[0].mxu0
  %v136 = vadd.f32 %v52, %v135
  %v137 = vpop.f32.mrb[0].mxu0
  %138 = vmatprep.mubr.f32.mxu0 0.0
  %139 = vmatmul.mubr.f32.gmra.mrb[0].mxu0 %v27
  %v140 = vpop.f32.mrb[0].mxu0
  %v141 = vadd.f32 %v52, %v140
  %v142 = vpop.f32.mrb[0].mxu0
  %143 = vmatprep.mubr.f32.mxu0 0.0
  %144 = vmatmul.mubr.f32.gmra.mrb[0].mxu0 %v28
  %v145 = vpop.f32.mrb[0].mxu0
  %v146 = vadd.f32 %v52, %v145
  %v147 = vpop.f32.mrb[0].mxu0
  %148 = vmatprep.mubr.f32.mxu0 0.0
  %149 = vmatmul.mubr.f32.gmra.mrb[0].mxu0 %v29
  %v150 = vpop.f32.mrb[0].mxu0
  %v151 = vadd.f32 %v52, %v150
  %v152 = vpop.f32.mrb[0].mxu0
  %153 = vmatprep.mubr.f32.mxu0 0.0
  %154 = vmatmul.mubr.f32.gmra.mrb[0].mxu0 %v30
  %v155 = vpop.f32.mrb[0].mxu0
  %v156 = vadd.f32 %v52, %v155
  %v157 = vpop.f32.mrb[0].mxu0
  %158 = vdwg.mxu0
  %v159 = vld [vmem:[%s2] sm:$0xff]
  %v160 = vld [vmem:[%s2 + $0x8] sm:$0xff]
  %v161 = vld [vmem:[%s2 + $0x10] sm:$0xff]
  %v162 = vld [vmem:[%s2 + $0x18] sm:$0xff]
  %v163 = vld [vmem:[%s2 + $0x20] sm:$0xff]
  %v164 = vld [vmem:[%s2 + $0x28] sm:$0xff]
  %v165 = vld [vmem:[%s2 + $0x30] sm:$0xff]
  %v166 = vld [vmem:[%s2 + $0x38] sm:$0xff]
  %v167 = vld [vmem:[%s2 + $0x40] sm:$0xff]
  %v168 = vld [vmem:[%s2 + $0x48] sm:$0xff]
  %v169 = vld [vmem:[%s2 + $0x50] sm:$0xff]
  %v170 = vld [vmem:[%s2 + $0x58] sm:$0xff]
  %v171 = vld [vmem:[%s2 + $0x60] sm:$0xff]
  %v172 = vld [vmem:[%s2 + $0x68] sm:$0xff]
  %v173 = vld [vmem:[%s2 + $0x70] sm:$0xff]
  %v174 = vld [vmem:[%s2 + $0x78] sm:$0xff]
  %175 = vmatprep.subr.mxu0 0.0
  %176 = vmatpush1.msra.mxu0 %v159
  %177 = vmatprep.subr.mxu0 0.0
  %178 = vmatpush1.msra.mxu0 %v160
  %179 = vmatprep.subr.mxu0 0.0
  %180 = vmatpush1.msra.mxu0 %v161
  %181 = vmatprep.subr.mxu0 0.0
  %182 = vmatpush1.msra.mxu0 %v162
  %183 = vmatprep.subr.mxu0 0.0
  %184 = vmatpush1.msra.mxu0 %v163
  %185 = vmatprep.subr.mxu0 0.0
  %186 = vmatpush1.msra.mxu0 %v164
  %187 = vmatprep.subr.mxu0 0.0
  %188 = vmatpush1.msra.mxu0 %v165
  %189 = vmatprep.subr.mxu0 0.0
  %190 = vmatpush1.msra.mxu0 %v166
  %191 = vmatprep.subr.mxu0 0.0
  %192 = vmatpush1.msra.mxu0 %v167
  %193 = vmatprep.subr.mxu0 0.0
  %194 = vmatpush1.msra.mxu0 %v168
  %195 = vmatprep.subr.mxu0 0.0
  %196 = vmatpush1.msra.mxu0 %v169
  %197 = vmatprep.subr.mxu0 0.0
  %198 = vmatpush1.msra.mxu0 %v170
  %199 = vmatprep.subr.mxu0 0.0
  %200 = vmatpush1.msra.mxu0 %v171
  %201 = vmatprep.subr.mxu0 0.0
  %202 = vmatpush1.msra.mxu0 %v172
  %203 = vmatprep.subr.mxu0 0.0
  %204 = vmatpush1.msra.mxu0 %v173
  %205 = vmatprep.subr.mxu0 0.0
  %206 = vmatpush1.msra.mxu0 %v174
  %207 = vmatprep.subr.mxu0 0.0
  %208 = vmatpush1.msra.mxu0 0.0
  %209 = vmatprep.subr.mxu0 0.0
  %210 = vmatpush1.msra.mxu0 0.0
  %211 = vmatprep.subr.mxu0 0.0
  %212 = vmatpush1.msra.mxu0 0.0
  %213 = vmatprep.subr.mxu0 0.0
  %214 = vmatpush1.msra.mxu0 0.0
  %215 = vmatprep.subr.mxu0 0.0
  %216 = vmatpush1.msra.mxu0 0.0
  %217 = vmatprep.subr.mxu0 0.0
  %218 = vmatpush1.msra.mxu0 0.0
  %219 = vmatprep.subr.mxu0 0.0
  %220 = vmatpush1.msra.mxu0 0.0
  %221 = vmatprep.subr.mxu0 0.0
  %222 = vmatpush1.msra.mxu0 0.0
  %223 = vmatprep.subr.mxu0 0.0
  %224 = vmatpush1.msra.mxu0 0.0
  %225 = vmatprep.subr.mxu0 0.0
  %226 = vmatpush1.msra.mxu0 0.0
  %227 = vmatprep.subr.mxu0 0.0
  %228 = vmatpush1.msra.mxu0 0.0
  %229 = vmatprep.subr.mxu0 0.0
  %230 = vmatpush1.msra.mxu0 0.0
  %231 = vmatprep.subr.mxu0 0.0
  %232 = vmatpush1.msra.mxu0 0.0
  %233 = vmatprep.subr.mxu0 0.0
  %234 = vmatpush1.msra.mxu0 0.0
  %235 = vmatprep.subr.mxu0 0.0
  %236 = vmatpush1.msra.mxu0 0.0
  %237 = vmatprep.subr.mxu0 0.0
  %238 = vmatpush1.msra.mxu0 0.0
  %239 = vmatprep.mubr.f32.mxu0 0.0
  %240 = vmatmul.mubr.f32.gmra.mrb[0].mxu0 0.0
  %v241 = vpop.f32.mrb[0].mxu0
  %v242 = vadd.f32 0.0, %v241
  %v243 = vpop.f32.mrb[0].mxu0
  %244 = vdwg.mxu0
  %v245 = vadd.f32 %v121, %v242
  %v246 = vtanh.pop %v245
  %247 = vmatprep.subr.mxu0 0.0
  %248 = vmatpush1.msra.mxu0 %v159
  %249 = vmatprep.subr.mxu0 0.0
  %250 = vmatpush1.msra.mxu0 %v160
  %251 = vmatprep.subr.mxu0 0.0
  %252 = vmatpush1.msra.mxu0 %v161
  %253 = vmatprep.subr.mxu0 0.0
  %254 = vmatpush1.msra.mxu0 %v162
  %255 = vmatprep.subr.mxu0 0.0
  %256 = vmatpush1.msra.mxu0 %v163
  %257 = vmatprep.subr.mxu0 0.0
  %258 = vmatpush1.msra.mxu0 %v164
  %259 = vmatprep.subr.mxu0 0.0
  %260 = vmatpush1.msra.mxu0 %v165
  %261 = vmatprep.subr.mxu0 0.0
  %262 = vmatpush1.msra.mxu0 %v166
  %263 = vmatprep.subr.mxu0 0.0
  %264 = vmatpush1.msra.mxu0 %v167
  %265 = vmatprep.subr.mxu0 0.0
  %266 = vmatpush1.msra.mxu0 %v168
  %267 = vmatprep.subr.mxu0 0.0
  %268 = vmatpush1.msra.mxu0 %v169
  %269 = vmatprep.subr.mxu0 0.0
  %270 = vmatpush1.msra.mxu0 %v170
  %271 = vmatprep.subr.mxu0 0.0
  %272 = vmatpush1.msra.mxu0 %v171
  %273 = vmatprep.subr.mxu0 0.0
  %274 = vmatpush1.msra.mxu0 %v172
  %275 = vmatprep.subr.mxu0 0.0
  %276 = vmatpush1.msra.mxu0 %v173
  %277 = vmatprep.subr.mxu0 0.0
  %278 = vmatpush1.msra.mxu0 %v174
  %279 = vmatprep.subr.mxu0 0.0
  %280 = vmatpush1.msra.mxu0 0.0
  %281 = vmatprep.subr.mxu0 0.0
  %282 = vmatpush1.msra.mxu0 0.0
  %283 = vmatprep.subr.mxu0 0.0
  %284 = vmatpush1.msra.mxu0 0.0
  %285 = vmatprep.subr.mxu0 0.0
  %286 = vmatpush1.msra.mxu0 0.0
  %287 = vmatprep.subr.mxu0 0.0
  %288 = vmatpush1.msra.mxu0 0.0
  %289 = vmatprep.subr.mxu0 0.0
  %290 = vmatpush1.msra.mxu0 0.0
  %291 = vmatprep.subr.mxu0 0.0
  %292 = vmatpush1.msra.mxu0 0.0
  %293 = vmatprep.subr.mxu0 0.0
  %294 = vmatpush1.msra.mxu0 0.0
  %295 = vmatprep.subr.mxu0 0.0
  %296 = vmatpush1.msra.mxu0 0.0
  %297 = vmatprep.subr.mxu0 0.0
  %298 = vmatpush1.msra.mxu0 0.0
  %299 = vmatprep.subr.mxu0 0.0
  %300 = vmatpush1.msra.mxu0 0.0
  %301 = vmatprep.subr.mxu0 0.0
  %302 = vmatpush1.msra.mxu0 0.0
  %303 = vmatprep.subr.mxu0 0.0
  %304 = vmatpush1.msra.mxu0 0.0
  %305 = vmatprep.subr.mxu0 0.0
  %306 = vmatpush1.msra.mxu0 0.0
  %307 = vmatprep.subr.mxu0 0.0
  %308 = vmatpush1.msra.mxu0 0.0
  %309 = vmatprep.subr.mxu0 0.0
  %310 = vmatpush1.msra.mxu0 0.0
  %311 = vmatprep.mubr.f32.mxu0 0.0
  %312 = vmatmul.mubr.f32.gmra.mrb[0].mxu0 %v246
  %v313 = vpop.f32.mrb[0].mxu0
  %v314 = vadd.f32 0.0, %v313
  %v315 = vpop.f32.mrb[0].mxu0
  %316 = vdwg.mxu0
  %v317 = vadd.f32 %v126, %v314
  %v318 = vtanh.pop %v317
  %319 = vmatprep.subr.mxu0 0.0
  %320 = vmatpush1.msra.mxu0 %v159
  %321 = vmatprep.subr.mxu0 0.0
  %322 = vmatpush1.msra.mxu0 %v160
  %323 = vmatprep.subr.mxu0 0.0
  %324 = vmatpush1.msra.mxu0 %v161
  %325 = vmatprep.subr.mxu0 0.0
  %326 = vmatpush1.msra.mxu0 %v162
  %327 = vmatprep.subr.mxu0 0.0
  %328 = vmatpush1.msra.mxu0 %v163
  %329 = vmatprep.subr.mxu0 0.0
  %330 = vmatpush1.msra.mxu0 %v164
  %331 = vmatprep.subr.mxu0 0.0
  %332 = vmatpush1.msra.mxu0 %v165
  %333 = vmatprep.subr.mxu0 0.0
  %334 = vmatpush1.msra.mxu0 %v166
  %335 = vmatprep.subr.mxu0 0.0
  %336 = vmatpush1.msra.mxu0 %v167
  %337 = vmatprep.subr.mxu0 0.0
  %338 = vmatpush1.msra.mxu0 %v168
  %339 = vmatprep.subr.mxu0 0.0
  %340 = vmatpush1.msra.mxu0 %v169
  %341 = vmatprep.subr.mxu0 0.0
  %342 = vmatpush1.msra.mxu0 %v170
  %343 = vmatprep.subr.mxu0 0.0
  %344 = vmatpush1.msra.mxu0 %v171
  %345 = vmatprep.subr.mxu0 0.0
  %346 = vmatpush1.msra.mxu0 %v172
  %347 = vmatprep.subr.mxu0 0.0
  %348 = vmatpush1.msra.mxu0 %v173
  %349 = vmatprep.subr.mxu0 0.0
  %350 = vmatpush1.msra.mxu0 %v174
  %351 = vmatprep.subr.mxu0 0.0
  %352 = vmatpush1.msra.mxu0 0.0
  %353 = vmatprep.subr.mxu0 0.0
  %354 = vmatpush1.msra.mxu0 0.0
  %355 = vmatprep.subr.mxu0 0.0
  %356 = vmatpush1.msra.mxu0 0.0
  %357 = vmatprep.subr.mxu0 0.0
  %358 = vmatpush1.msra.mxu0 0.0
  %359 = vmatprep.subr.mxu0 0.0
  %360 = vmatpush1.msra.mxu0 0.0
  %361 = vmatprep.subr.mxu0 0.0
  %362 = vmatpush1.msra.mxu0 0.0
  %363 = vmatprep.subr.mxu0 0.0
  %364 = vmatpush1.msra.mxu0 0.0
  %365 = vmatprep.subr.mxu0 0.0
  %366 = vmatpush1.msra.mxu0 0.0
  %367 = vmatprep.subr.mxu0 0.0
  %368 = vmatpush1.msra.mxu0 0.0
  %369 = vmatprep.subr.mxu0 0.0
  %370 = vmatpush1.msra.mxu0 0.0
  %371 = vmatprep.subr.mxu0 0.0
  %372 = vmatpush1.msra.mxu0 0.0
  %373 = vmatprep.subr.mxu0 0.0
  %374 = vmatpush1.msra.mxu0 0.0
  %375 = vmatprep.subr.mxu0 0.0
  %376 = vmatpush1.msra.mxu0 0.0
  %377 = vmatprep.subr.mxu0 0.0
  %378 = vmatpush1.msra.mxu0 0.0
  %379 = vmatprep.subr.mxu0 0.0
  %380 = vmatpush1.msra.mxu0 0.0
  %381 = vmatprep.subr.mxu0 0.0
  %382 = vmatpush1.msra.mxu0 0.0
  %383 = vmatprep.mubr.f32.mxu0 0.0
  %384 = vmatmul.mubr.f32.gmra.mrb[0].mxu0 %v318
  %v385 = vpop.f32.mrb[0].mxu0
  %v386 = vadd.f32 0.0, %v385
  %v387 = vpop.f32.mrb[0].mxu0
  %388 = vdwg.mxu0
  %v389 = vadd.f32 %v131, %v386
  %v390 = vtanh.pop %v389
  %391 = vmatprep.subr.mxu0 0.0
  %392 = vmatpush1.msra.mxu0 %v159
  %393 = vmatprep.subr.mxu0 0.0
  %394 = vmatpush1.msra.mxu0 %v160
  %395 = vmatprep.subr.mxu0 0.0
  %396 = vmatpush1.msra.mxu0 %v161
  %397 = vmatprep.subr.mxu0 0.0
  %398 = vmatpush1.msra.mxu0 %v162
  %399 = vmatprep.subr.mxu0 0.0
  %400 = vmatpush1.msra.mxu0 %v163
  %401 = vmatprep.subr.mxu0 0.0
  %402 = vmatpush1.msra.mxu0 %v164
  %403 = vmatprep.subr.mxu0 0.0
  %404 = vmatpush1.msra.mxu0 %v165
  %405 = vmatprep.subr.mxu0 0.0
  %406 = vmatpush1.msra.mxu0 %v166
  %407 = vmatprep.subr.mxu0 0.0
  %408 = vmatpush1.msra.mxu0 %v167
  %409 = vmatprep.subr.mxu0 0.0
  %410 = vmatpush1.msra.mxu0 %v168
  %411 = vmatprep.subr.mxu0 0.0
  %412 = vmatpush1.msra.mxu0 %v169
  %413 = vmatprep.subr.mxu0 0.0
  %414 = vmatpush1.msra.mxu0 %v170
  %415 = vmatprep.subr.mxu0 0.0
  %416 = vmatpush1.msra.mxu0 %v171
  %417 = vmatprep.subr.mxu0 0.0
  %418 = vmatpush1.msra.mxu0 %v172
  %419 = vmatprep.subr.mxu0 0.0
  %420 = vmatpush1.msra.mxu0 %v173
  %421 = vmatprep.subr.mxu0 0.0
  %422 = vmatpush1.msra.mxu0 %v174
  %423 = vmatprep.subr.mxu0 0.0
  %424 = vmatpush1.msra.mxu0 0.0
  %425 = vmatprep.subr.mxu0 0.0
  %426 = vmatpush1.msra.mxu0 0.0
  %427 = vmatprep.subr.mxu0 0.0
  %428 = vmatpush1.msra.mxu0 0.0
  %429 = vmatprep.subr.mxu0 0.0
  %430 = vmatpush1.msra.mxu0 0.0
  %431 = vmatprep.subr.mxu0 0.0
  %432 = vmatpush1.msra.mxu0 0.0
  %433 = vmatprep.subr.mxu0 0.0
  %434 = vmatpush1.msra.mxu0 0.0
  %435 = vmatprep.subr.mxu0 0.0
  %436 = vmatpush1.msra.mxu0 0.0
  %437 = vmatprep.subr.mxu0 0.0
  %438 = vmatpush1.msra.mxu0 0.0
  %439 = vmatprep.subr.mxu0 0.0
  %440 = vmatpush1.msra.mxu0 0.0
  %441 = vmatprep.subr.mxu0 0.0
  %442 = vmatpush1.msra.mxu0 0.0
  %443 = vmatprep.subr.mxu0 0.0
  %444 = vmatpush1.msra.mxu0 0.0
  %445 = vmatprep.subr.mxu0 0.0
  %446 = vmatpush1.msra.mxu0 0.0
  %447 = vmatprep.subr.mxu0 0.0
  %448 = vmatpush1.msra.mxu0 0.0
  %449 = vmatprep.subr.mxu0 0.0
  %450 = vmatpush1.msra.mxu0 0.0
  %451 = vmatprep.subr.mxu0 0.0
  %452 = vmatpush1.msra.mxu0 0.0
  %453 = vmatprep.subr.mxu0 0.0
  %454 = vmatpush1.msra.mxu0 0.0
  %455 = vmatprep.mubr.f32.mxu0 0.0
  %456 = vmatmul.mubr.f32.gmra.mrb[0].mxu0 %v390
  %v457 = vpop.f32.mrb[0].mxu0
  %v458 = vadd.f32 0.0, %v457
  %v459 = vpop.f32.mrb[0].mxu0
  %460 = vdwg.mxu0
  %v461 = vadd.f32 %v136, %v458
  %v462 = vtanh.pop %v461
  %463 = vmatprep.subr.mxu0 0.0
  %464 = vmatpush1.msra.mxu0 %v159
  %465 = vmatprep.subr.mxu0 0.0
  %466 = vmatpush1.msra.mxu0 %v160
  %467 = vmatprep.subr.mxu0 0.0
  %468 = vmatpush1.msra.mxu0 %v161
  %469 = vmatprep.subr.mxu0 0.0
  %470 = vmatpush1.msra.mxu0 %v162
  %471 = vmatprep.subr.mxu0 0.0
  %472 = vmatpush1.msra.mxu0 %v163
  %473 = vmatprep.subr.mxu0 0.0
  %474 = vmatpush1.msra.mxu0 %v164
  %475 = vmatprep.subr.mxu0 0.0
  %476 = vmatpush1.msra.mxu0 %v165
  %477 = vmatprep.subr.mxu0 0.0
  %478 = vmatpush1.msra.mxu0 %v166
  %479 = vmatprep.subr.mxu0 0.0
  %480 = vmatpush1.msra.mxu0 %v167
  %481 = vmatprep.subr.mxu0 0.0
  %482 = vmatpush1.msra.mxu0 %v168
  %483 = vmatprep.subr.mxu0 0.0
  %484 = vmatpush1.msra.mxu0 %v169
  %485 = vmatprep.subr.mxu0 0.0
  %486 = vmatpush1.msra.mxu0 %v170
  %487 = vmatprep.subr.mxu0 0.0
  %488 = vmatpush1.msra.mxu0 %v171
  %489 = vmatprep.subr.mxu0 0.0
  %490 = vmatpush1.msra.mxu0 %v172
  %491 = vmatprep.subr.mxu0 0.0
  %492 = vmatpush1.msra.mxu0 %v173
  %493 = vmatprep.subr.mxu0 0.0
  %494 = vmatpush1.msra.mxu0 %v174
  %495 = vmatprep.subr.mxu0 0.0
  %496 = vmatpush1.msra.mxu0 0.0
  %497 = vmatprep.subr.mxu0 0.0
  %498 = vmatpush1.msra.mxu0 0.0
  %499 = vmatprep.subr.mxu0 0.0
  %500 = vmatpush1.msra.mxu0 0.0
  %501 = vmatprep.subr.mxu0 0.0
  %502 = vmatpush1.msra.mxu0 0.0
  %503 = vmatprep.subr.mxu0 0.0
  %504 = vmatpush1.msra.mxu0 0.0
  %505 = vmatprep.subr.mxu0 0.0
  %506 = vmatpush1.msra.mxu0 0.0
  %507 = vmatprep.subr.mxu0 0.0
  %508 = vmatpush1.msra.mxu0 0.0
  %509 = vmatprep.subr.mxu0 0.0
  %510 = vmatpush1.msra.mxu0 0.0
  %511 = vmatprep.subr.mxu0 0.0
  %512 = vmatpush1.msra.mxu0 0.0
  %513 = vmatprep.subr.mxu0 0.0
  %514 = vmatpush1.msra.mxu0 0.0
  %515 = vmatprep.subr.mxu0 0.0
  %516 = vmatpush1.msra.mxu0 0.0
  %517 = vmatprep.subr.mxu0 0.0
  %518 = vmatpush1.msra.mxu0 0.0
  %519 = vmatprep.subr.mxu0 0.0
  %520 = vmatpush1.msra.mxu0 0.0
  %521 = vmatprep.subr.mxu0 0.0
  %522 = vmatpush1.msra.mxu0 0.0
  %523 = vmatprep.subr.mxu0 0.0
  %524 = vmatpush1.msra.mxu0 0.0
  %525 = vmatprep.subr.mxu0 0.0
  %526 = vmatpush1.msra.mxu0 0.0
  %527 = vmatprep.mubr.f32.mxu0 0.0
  %528 = vmatmul.mubr.f32.gmra.mrb[0].mxu0 %v462
  %v529 = vpop.f32.mrb[0].mxu0
  %v530 = vadd.f32 0.0, %v529
  %v531 = vpop.f32.mrb[0].mxu0
  %532 = vdwg.mxu0
  %v533 = vadd.f32 %v141, %v530
  %v534 = vtanh.pop %v533
  %535 = vmatprep.subr.mxu0 0.0
  %536 = vmatpush1.msra.mxu0 %v159
  %537 = vmatprep.subr.mxu0 0.0
  %538 = vmatpush1.msra.mxu0 %v160
  %539 = vmatprep.subr.mxu0 0.0
  %540 = vmatpush1.msra.mxu0 %v161
  %541 = vmatprep.subr.mxu0 0.0
  %542 = vmatpush1.msra.mxu0 %v162
  %543 = vmatprep.subr.mxu0 0.0
  %544 = vmatpush1.msra.mxu0 %v163
  %545 = vmatprep.subr.mxu0 0.0
  %546 = vmatpush1.msra.mxu0 %v164
  %547 = vmatprep.subr.mxu0 0.0
  %548 = vmatpush1.msra.mxu0 %v165
  %549 = vmatprep.subr.mxu0 0.0
  %550 = vmatpush1.msra.mxu0 %v166
  %551 = vmatprep.subr.mxu0 0.0
  %552 = vmatpush1.msra.mxu0 %v167
  %553 = vmatprep.subr.mxu0 0.0
  %554 = vmatpush1.msra.mxu0 %v168
  %555 = vmatprep.subr.mxu0 0.0
  %556 = vmatpush1.msra.mxu0 %v169
  %557 = vmatprep.subr.mxu0 0.0
  %558 = vmatpush1.msra.mxu0 %v170
  %559 = vmatprep.subr.mxu0 0.0
  %560 = vmatpush1.msra.mxu0 %v171
  %561 = vmatprep.subr.mxu0 0.0
  %562 = vmatpush1.msra.mxu0 %v172
  %563 = vmatprep.subr.mxu0 0.0
  %564 = vmatpush1.msra.mxu0 %v173
  %565 = vmatprep.subr.mxu0 0.0
  %566 = vmatpush1.msra.mxu0 %v174
  %567 = vmatprep.subr.mxu0 0.0
  %568 = vmatpush1.msra.mxu0 0.0
  %569 = vmatprep.subr.mxu0 0.0
  %570 = vmatpush1.msra.mxu0 0.0
  %571 = vmatprep.subr.mxu0 0.0
  %572 = vmatpush1.msra.mxu0 0.0
  %573 = vmatprep.subr.mxu0 0.0
  %574 = vmatpush1.msra.mxu0 0.0
  %575 = vmatprep.subr.mxu0 0.0
  %576 = vmatpush1.msra.mxu0 0.0
  %577 = vmatprep.subr.mxu0 0.0
  %578 = vmatpush1.msra.mxu0 0.0
  %579 = vmatprep.subr.mxu0 0.0
  %580 = vmatpush1.msra.mxu0 0.0
  %581 = vmatprep.subr.mxu0 0.0
  %582 = vmatpush1.msra.mxu0 0.0
  %583 = vmatprep.subr.mxu0 0.0
  %584 = vmatpush1.msra.mxu0 0.0
  %585 = vmatprep.subr.mxu0 0.0
  %586 = vmatpush1.msra.mxu0 0.0
  %587 = vmatprep.subr.mxu0 0.0
  %588 = vmatpush1.msra.mxu0 0.0
  %589 = vmatprep.subr.mxu0 0.0
  %590 = vmatpush1.msra.mxu0 0.0
  %591 = vmatprep.subr.mxu0 0.0
  %592 = vmatpush1.msra.mxu0 0.0
  %593 = vmatprep.subr.mxu0 0.0
  %594 = vmatpush1.msra.mxu0 0.0
  %595 = vmatprep.subr.mxu0 0.0
  %596 = vmatpush1.msra.mxu0 0.0
  %597 = vmatprep.subr.mxu0 0.0
  %598 = vmatpush1.msra.mxu0 0.0
  %599 = vmatprep.mubr.f32.mxu0 0.0
  %600 = vmatmul.mubr.f32.gmra.mrb[0].mxu0 %v534
  %v601 = vpop.f32.mrb[0].mxu0
  %v602 = vadd.f32 0.0, %v601
  %v603 = vpop.f32.mrb[0].mxu0
  %604 = vdwg.mxu0
  %v605 = vadd.f32 %v146, %v602
  %v606 = vtanh.pop %v605
  %607 = vmatprep.subr.mxu0 0.0
  %608 = vmatpush1.msra.mxu0 %v159
  %609 = vmatprep.subr.mxu0 0.0
  %610 = vmatpush1.msra.mxu0 %v160
  %611 = vmatprep.subr.mxu0 0.0
  %612 = vmatpush1.msra.mxu0 %v161
  %613 = vmatprep.subr.mxu0 0.0
  %614 = vmatpush1.msra.mxu0 %v162
  %615 = vmatprep.subr.mxu0 0.0
  %616 = vmatpush1.msra.mxu0 %v163
  %617 = vmatprep.subr.mxu0 0.0
  %618 = vmatpush1.msra.mxu0 %v164
  %619 = vmatprep.subr.mxu0 0.0
  %620 = vmatpush1.msra.mxu0 %v165
  %621 = vmatprep.subr.mxu0 0.0
  %622 = vmatpush1.msra.mxu0 %v166
  %623 = vmatprep.subr.mxu0 0.0
  %624 = vmatpush1.msra.mxu0 %v167
  %625 = vmatprep.subr.mxu0 0.0
  %626 = vmatpush1.msra.mxu0 %v168
  %627 = vmatprep.subr.mxu0 0.0
  %628 = vmatpush1.msra.mxu0 %v169
  %629 = vmatprep.subr.mxu0 0.0
  %630 = vmatpush1.msra.mxu0 %v170
  %631 = vmatprep.subr.mxu0 0.0
  %632 = vmatpush1.msra.mxu0 %v171
  %633 = vmatprep.subr.mxu0 0.0
  %634 = vmatpush1.msra.mxu0 %v172
  %635 = vmatprep.subr.mxu0 0.0
  %636 = vmatpush1.msra.mxu0 %v173
  %637 = vmatprep.subr.mxu0 0.0
  %638 = vmatpush1.msra.mxu0 %v174
  %639 = vmatprep.subr.mxu0 0.0
  %640 = vmatpush1.msra.mxu0 0.0
  %641 = vmatprep.subr.mxu0 0.0
  %642 = vmatpush1.msra.mxu0 0.0
  %643 = vmatprep.subr.mxu0 0.0
  %644 = vmatpush1.msra.mxu0 0.0
  %645 = vmatprep.subr.mxu0 0.0
  %646 = vmatpush1.msra.mxu0 0.0
  %647 = vmatprep.subr.mxu0 0.0
  %648 = vmatpush1.msra.mxu0 0.0
  %649 = vmatprep.subr.mxu0 0.0
  %650 = vmatpush1.msra.mxu0 0.0
  %651 = vmatprep.subr.mxu0 0.0
  %652 = vmatpush1.msra.mxu0 0.0
  %653 = vmatprep.subr.mxu0 0.0
  %654 = vmatpush1.msra.mxu0 0.0
  %655 = vmatprep.subr.mxu0 0.0
  %656 = vmatpush1.msra.mxu0 0.0
  %657 = vmatprep.subr.mxu0 0.0
  %658 = vmatpush1.msra.mxu0 0.0
  %659 = vmatprep.subr.mxu0 0.0
  %660 = vmatpush1.msra.mxu0 0.0
  %661 = vmatprep.subr.mxu0 0.0
  %662 = vmatpush1.msra.mxu0 0.0
  %663 = vmatprep.subr.mxu0 0.0
  %664 = vmatpush1.msra.mxu0 0.0
  %665 = vmatprep.subr.mxu0 0.0
  %666 = vmatpush1.msra.mxu0 0.0
  %667 = vmatprep.subr.mxu0 0.0
  %668 = vmatpush1.msra.mxu0 0.0
  %669 = vmatprep.subr.mxu0 0.0
  %670 = vmatpush1.msra.mxu0 0.0
  %671 = vmatprep.mubr.f32.mxu0 0.0
  %672 = vmatmul.mubr.f32.gmra.mrb[0].mxu0 %v606
  %v673 = vpop.f32.mrb[0].mxu0
  %v674 = vadd.f32 0.0, %v673
  %v675 = vpop.f32.mrb[0].mxu0
  %676 = vdwg.mxu0
  %v677 = vadd.f32 %v151, %v674
  %v678 = vtanh.pop %v677
  %679 = vmatprep.subr.mxu0 0.0
  %680 = vmatpush1.msra.mxu0 %v159
  %681 = vmatprep.subr.mxu0 0.0
  %682 = vmatpush1.msra.mxu0 %v160
  %683 = vmatprep.subr.mxu0 0.0
  %684 = vmatpush1.msra.mxu0 %v161
  %685 = vmatprep.subr.mxu0 0.0
  %686 = vmatpush1.msra.mxu0 %v162
  %687 = vmatprep.subr.mxu0 0.0
  %688 = vmatpush1.msra.mxu0 %v163
  %689 = vmatprep.subr.mxu0 0.0
  %690 = vmatpush1.msra.mxu0 %v164
  %691 = vmatprep.subr.mxu0 0.0
  %692 = vmatpush1.msra.mxu0 %v165
  %693 = vmatprep.subr.mxu0 0.0
  %694 = vmatpush1.msra.mxu0 %v166
  %695 = vmatprep.subr.mxu0 0.0
  %696 = vmatpush1.msra.mxu0 %v167
  %697 = vmatprep.subr.mxu0 0.0
  %698 = vmatpush1.msra.mxu0 %v168
  %699 = vmatprep.subr.mxu0 0.0
  %700 = vmatpush1.msra.mxu0 %v169
  %701 = vmatprep.subr.mxu0 0.0
  %702 = vmatpush1.msra.mxu0 %v170
  %703 = vmatprep.subr.mxu0 0.0
  %704 = vmatpush1.msra.mxu0 %v171
  %705 = vmatprep.subr.mxu0 0.0
  %706 = vmatpush1.msra.mxu0 %v172
  %707 = vmatprep.subr.mxu0 0.0
  %708 = vmatpush1.msra.mxu0 %v173
  %709 = vmatprep.subr.mxu0 0.0
  %710 = vmatpush1.msra.mxu0 %v174
  %711 = vmatprep.subr.mxu0 0.0
  %712 = vmatpush1.msra.mxu0 0.0
  %713 = vmatprep.subr.mxu0 0.0
  %714 = vmatpush1.msra.mxu0 0.0
  %715 = vmatprep.subr.mxu0 0.0
  %716 = vmatpush1.msra.mxu0 0.0
  %717 = vmatprep.subr.mxu0 0.0
  %718 = vmatpush1.msra.mxu0 0.0
  %719 = vmatprep.subr.mxu0 0.0
  %720 = vmatpush1.msra.mxu0 0.0
  %721 = vmatprep.subr.mxu0 0.0
  %722 = vmatpush1.msra.mxu0 0.0
  %723 = vmatprep.subr.mxu0 0.0
  %724 = vmatpush1.msra.mxu0 0.0
  %725 = vmatprep.subr.mxu0 0.0
  %726 = vmatpush1.msra.mxu0 0.0
  %727 = vmatprep.subr.mxu0 0.0
  %728 = vmatpush1.msra.mxu0 0.0
  %729 = vmatprep.subr.mxu0 0.0
  %730 = vmatpush1.msra.mxu0 0.0
  %731 = vmatprep.subr.mxu0 0.0
  %732 = vmatpush1.msra.mxu0 0.0
  %733 = vmatprep.subr.mxu0 0.0
  %734 = vmatpush1.msra.mxu0 0.0
  %735 = vmatprep.subr.mxu0 0.0
  %736 = vmatpush1.msra.mxu0 0.0
  %737 = vmatprep.subr.mxu0 0.0
  %738 = vmatpush1.msra.mxu0 0.0
  %739 = vmatprep.subr.mxu0 0.0
  %740 = vmatpush1.msra.mxu0 0.0
  %741 = vmatprep.subr.mxu0 0.0
  %742 = vmatpush1.msra.mxu0 0.0
  %743 = vmatprep.mubr.f32.mxu0 0.0
  %744 = vmatmul.mubr.f32.gmra.mrb[0].mxu0 %v678
  %v745 = vpop.f32.mrb[0].mxu0
  %v746 = vadd.f32 0.0, %v745
  %v747 = vpop.f32.mrb[0].mxu0
  %748 = vdwg.mxu0
  %v749 = vadd.f32 %v156, %v746
  %v750 = vtanh.pop %v749
  %v751 = vld [vmem:[%s4] sm:$0xff]
  %v752 = vld [vmem:[%s4 + $0x8] sm:$0xff]
  %v753 = vld [vmem:[%s4 + $0x10] sm:$0xff]
  %v754 = vld [vmem:[%s4 + $0x18] sm:$0xff]
  %v755 = vld [vmem:[%s4 + $0x20] sm:$0xff]
  %v756 = vld [vmem:[%s4 + $0x28] sm:$0xff]
  %v757 = vld [vmem:[%s4 + $0x30] sm:$0xff]
  %v758 = vld [vmem:[%s4 + $0x38] sm:$0xff]
  %v759 = vld [vmem:[%s4 + $0x40] sm:$0xff]
  %v760 = vld [vmem:[%s4 + $0x48] sm:$0xff]
  %v761 = vld [vmem:[%s4 + $0x50] sm:$0xff]
  %v762 = vld [vmem:[%s4 + $0x58] sm:$0xff]
  %v763 = vld [vmem:[%s4 + $0x60] sm:$0xff]
  %v764 = vld [vmem:[%s4 + $0x68] sm:$0xff]
  %v765 = vld [vmem:[%s4 + $0x70] sm:$0xff]
  %v766 = vld [vmem:[%s4 + $0x78] sm:$0xff]
  %v767 = vld [vmem:[%s5] sm:$0x1]
  %v769 = vlaneseq
  %v770 = vshrl.u32 %v769, 7
  %v771 = vsub.s32 0, %v770
  %v772 = vrot.slane %v767, %v771
  %774 = vmatprep.subr.mxu0 0.0
  %775 = vmatpush1.msra.mxu0 %v751
  %776 = vmatprep.subr.mxu0 0.0
  %777 = vmatpush1.msra.mxu0 %v752
  %778 = vmatprep.subr.mxu0 0.0
  %779 = vmatpush1.msra.mxu0 %v753
  %780 = vmatprep.subr.mxu0 0.0
  %781 = vmatpush1.msra.mxu0 %v754
  %782 = vmatprep.subr.mxu0 0.0
  %783 = vmatpush1.msra.mxu0 %v755
  %784 = vmatprep.subr.mxu0 0.0
  %785 = vmatpush1.msra.mxu0 %v756
  %786 = vmatprep.subr.mxu0 0.0
  %787 = vmatpush1.msra.mxu0 %v757
  %788 = vmatprep.subr.mxu0 0.0
  %789 = vmatpush1.msra.mxu0 %v758
  %790 = vmatprep.subr.mxu0 0.0
  %791 = vmatpush1.msra.mxu0 %v759
  %792 = vmatprep.subr.mxu0 0.0
  %793 = vmatpush1.msra.mxu0 %v760
  %794 = vmatprep.subr.mxu0 0.0
  %795 = vmatpush1.msra.mxu0 %v761
  %796 = vmatprep.subr.mxu0 0.0
  %797 = vmatpush1.msra.mxu0 %v762
  %798 = vmatprep.subr.mxu0 0.0
  %799 = vmatpush1.msra.mxu0 %v763
  %800 = vmatprep.subr.mxu0 0.0
  %801 = vmatpush1.msra.mxu0 %v764
  %802 = vmatprep.subr.mxu0 0.0
  %803 = vmatpush1.msra.mxu0 %v765
  %804 = vmatprep.subr.mxu0 0.0
  %805 = vmatpush1.msra.mxu0 %v766
  %806 = vmatprep.subr.mxu0 0.0
  %807 = vmatpush1.msra.mxu0 0.0
  %808 = vmatprep.subr.mxu0 0.0
  %809 = vmatpush1.msra.mxu0 0.0
  %810 = vmatprep.subr.mxu0 0.0
  %811 = vmatpush1.msra.mxu0 0.0
  %812 = vmatprep.subr.mxu0 0.0
  %813 = vmatpush1.msra.mxu0 0.0
  %814 = vmatprep.subr.mxu0 0.0
  %815 = vmatpush1.msra.mxu0 0.0
  %816 = vmatprep.subr.mxu0 0.0
  %817 = vmatpush1.msra.mxu0 0.0
  %818 = vmatprep.subr.mxu0 0.0
  %819 = vmatpush1.msra.mxu0 0.0
  %820 = vmatprep.subr.mxu0 0.0
  %821 = vmatpush1.msra.mxu0 0.0
  %822 = vmatprep.subr.mxu0 0.0
  %823 = vmatpush1.msra.mxu0 0.0
  %824 = vmatprep.subr.mxu0 0.0
  %825 = vmatpush1.msra.mxu0 0.0
  %826 = vmatprep.subr.mxu0 0.0
  %827 = vmatpush1.msra.mxu0 0.0
  %828 = vmatprep.subr.mxu0 0.0
  %829 = vmatpush1.msra.mxu0 0.0
  %830 = vmatprep.subr.mxu0 0.0
  %831 = vmatpush1.msra.mxu0 0.0
  %832 = vmatprep.subr.mxu0 0.0
  %833 = vmatpush1.msra.mxu0 0.0
  %834 = vmatprep.subr.mxu0 0.0
  %835 = vmatpush1.msra.mxu0 0.0
  %836 = vmatprep.subr.mxu0 0.0
  %837 = vmatpush1.msra.mxu0 0.0
  %838 = vmatprep.mubr.f32.mxu0 0.0
  %839 = vmatmul.mubr.f32.gmra.mrb[0].mxu0 %v750
  %v840 = vpop.f32.mrb[0].mxu0
  %v841 = vadd.f32 %v772, %v840
  %v842 = vpop.f32.mrb[0].mxu0
  %843 = vdwg.mxu0
  %844 = vst [vmem:[%s6] sm:$0xff] %v841
  // Predicated region
  $region26: #{marathi_transcription_forward.1} parent=0 // pred_check
    _
  $region27: #{marathi_transcription_forward.1} parent=0 // pred_check_branch
    %846 = sbr.rel (0) target = $region29
  $region28: #{marathi_transcription_forward.1} parent=0 // pred_region
    _
  $region29: #{marathi_transcription_forward.1} parent=0 // pred_fallthru
    _
  // Predicated region
  $region30: #{marathi_transcription_forward.1} parent=0 // pred_check
    _
  $region31: #{marathi_transcription_forward.1} parent=0 // pred_check_branch
    %848 = sbr.rel (0) target = $region33
  $region32: #{marathi_transcription_forward.1} parent=0 // pred_region
    _
  $region33: #{marathi_transcription_forward.1} parent=0 // pred_fallthru
    _

</llo_original>
